<compile_context>
chip_gen: v6e
topology: v6e:2x2x1
jax: 0.10.0
libtpu: 0.0.40
codegen_flags: <defaults>
</compile_context>

<pallas_src>
import functools
import math

import jax
import jax.numpy as jnp
from jax import lax
from jax.experimental import pallas as pl
from jax.experimental.pallas import tpu as pltpu

_LANE = 128
_SUBLANE = 8
_MAX_SINGLE_K = 8192  # a non-128-aligned K up to this size is taken as one full tile


def _round_up(x, m):
    return ((x + m - 1) // m) * m


def _largest_tile(total, unit, cap):
    """Largest multiple of `unit` that divides `total` and is <= cap (total % unit == 0)."""
    q = total // unit
    best = 1
    for c in range(1, min(max(cap // unit, 1), q) + 1):
        if q % c == 0:
            best = c
    return best * unit


# ----------------------------------------------------------------------------
# Kernels
# ----------------------------------------------------------------------------
def _linear_kernel_fused(x_ref, w_ref, b_ref, o_ref, *, cast_dtype):
    """Accumulates directly into o_ref (used when out dtype is f32 or K fits one tile)."""
    k = pl.program_id(2)
    x = x_ref[...]
    if cast_dtype is not None:
        x = x.astype(cast_dtype)
    part = jnp.dot(x, w_ref[...], preferred_element_type=jnp.float32)

    @pl.when(k == 0)
    def _():
        o_ref[...] = (b_ref[...] + part).astype(o_ref.dtype)

    @pl.when(k != 0)
    def _():
        o_ref[...] = (o_ref[...].astype(jnp.float32) + part).astype(o_ref.dtype)


def _linear_kernel_scratch(x_ref, w_ref, b_ref, o_ref, acc_ref, *, cast_dtype):
    """f32 VMEM accumulator (used for low-precision outputs with multi-step K)."""
    k = pl.program_id(2)
    x = x_ref[...]
    if cast_dtype is not None:
        x = x.astype(cast_dtype)
    part = jnp.dot(x, w_ref[...], preferred_element_type=jnp.float32)

    @pl.when(k == 0)
    def _():
        acc_ref[...] = b_ref[...] + part

    @pl.when(k != 0)
    def _():
        acc_ref[...] = acc_ref[...] + part

    @pl.when(k == pl.num_programs(2) - 1)
    def _():
        o_ref[...] = acc_ref[...].astype(o_ref.dtype)


# ----------------------------------------------------------------------------
# Wrappers
# ----------------------------------------------------------------------------
def prepare_linear_norm_weights(weight, bias=None, *, use_bf16=True):
    """One-time per layer: transpose PyTorch (out,in) weight to (K, N_pad), pad N (and K
    if needed) to lane-dense multiples of 128, cast to the compute dtype, and prepare a
    (1, N_pad) f32 bias row.  Amortizes to zero on the hot path."""
    out_dim, in_dim = weight.shape
    n_pad = _round_up(out_dim, _LANE)
    if in_dim % _LANE == 0 or in_dim <= _MAX_SINGLE_K:
        k_pad = in_dim                      # no K padding needed
    else:
        k_pad = _round_up(in_dim, _LANE)    # rare: huge, non-aligned K
    cdt = jnp.bfloat16 if use_bf16 else weight.dtype
    w_io = weight.T.astype(cdt)             # (in_dim, out_dim)
    if (k_pad, n_pad) != (in_dim, out_dim):
        w_io = jnp.pad(w_io, ((0, k_pad - in_dim), (0, n_pad - out_dim)))
    b = jnp.zeros((out_dim,), jnp.float32) if bias is None else jnp.asarray(bias, jnp.float32)
    if n_pad != out_dim:
        b = jnp.pad(b, (0, n_pad - out_dim))
    return w_io, b.reshape(1, n_pad), out_dim


def linear_norm_apply(x, w_io, b_row, out_dim, *, use_bf16=True,
                      tm_cap=512, tn_cap=512, tk_cap=1024):
    """Pallas path: y = x @ w_io + b.  w_io is the prepared (K_pad, N_pad) weight."""
    lead = x.shape[:-1]
    in_dim = x.shape[-1]
    m = math.prod(lead) if lead else 1
    k_pad, n_pad = w_io.shape

    x2 = x.reshape(m, in_dim)
    out_dtype = x.dtype

    # bf16 compute: cast the tile inside the kernel (no extra HBM pass over x).
    cast_dtype = None
    if use_bf16 and x2.dtype != jnp.bfloat16:
        cast_dtype = jnp.bfloat16

    if k_pad != in_dim:  # rare (huge non-128-aligned K); zero K-padding keeps the sum exact
        x2 = jnp.pad(x2, ((0, 0), (0, k_pad - in_dim)))

    # ---- tile sizes --------------------------------------------------------
    if k_pad % _LANE == 0:
        tk = _largest_tile(k_pad, _LANE, max(tk_cap, _LANE))
    else:
        tk = k_pad                       # full-K single tile (no ragged K -> exact sum)
    tn = _largest_tile(n_pad, _LANE, max(tn_cap, _LANE))
    tm_align = 16 if (cast_dtype is not None or x2.dtype == jnp.bfloat16) else _SUBLANE
    tm = m if m <= tm_cap else tm_cap    # no M padding; ragged last M block is masked

    grid_m = pl.cdiv(m, tm)
    grid_n = n_pad // tn
    grid_k = k_pad // tk

    # v7x has 2 TensorCores: make sure the parallel (M,N) grid has >= 2 blocks.
    if grid_m * grid_n == 1 and m >= 2 * tm_align:
        tm = _round_up(-(-m // 2), tm_align)
        grid_m = pl.cdiv(m, tm)

    use_scratch = (grid_k > 1) and (out_dtype != jnp.float32)
    kernel = functools.partial(
        _linear_kernel_scratch if use_scratch else _linear_kernel_fused,
        cast_dtype=cast_dtype)
    scratch = [pltpu.VMEM((tm, tn), jnp.float32)] if use_scratch else []

    # Explicit scoped-VMEM budget (double-buffered tiles + accumulator), capped for v7x.
    isz = lambda d: jnp.dtype(d).itemsize
    est = 2 * (tm * tk * isz(x2.dtype) + tk * tn * isz(w_io.dtype)
               + tm * tn * isz(out_dtype) + tn * 4)
    if use_scratch:
        est += tm * tn * 4
    vmem_limit = int(min(max(2 * est + (4 << 20), 16 << 20), 48 << 20))

    out = pl.pallas_call(
        kernel,
        out_shape=jax.ShapeDtypeStruct((m, n_pad), out_dtype),
        grid_spec=pltpu.PrefetchScalarGridSpec(
            num_scalar_prefetch=0,
            grid=(grid_m, grid_n, grid_k),
            in_specs=[
                pl.BlockSpec((tm, tk), lambda i, j, k: (i, k)),   # x tile
                pl.BlockSpec((tk, tn), lambda i, j, k: (k, j)),   # weight (K,N) tile
                pl.BlockSpec((1, tn), lambda i, j, k: (0, j)),    # bias row
            ],
            out_specs=pl.BlockSpec((tm, tn), lambda i, j, k: (i, j)),
            scratch_shapes=scratch,
        ),
        compiler_params=pltpu.CompilerParams(
            dimension_semantics=("parallel", "parallel", "arbitrary"),
            vmem_limit_bytes=vmem_limit,
        ),
    )(x2, w_io, b_row)

    if n_pad != out_dim:
        out = out[:, :out_dim]
    return out.reshape(*lead, out_dim)


def linear_norm(x, weight, bias=None, *, use_bf16=True,
                min_rows=1024, min_work=1 << 27, **pallas_kw):
    """PyTorch LinearNorm forward: y = x @ weight.T + bias.

    weight: (out_dim, in_dim) PyTorch nn.Linear layout.  Small/medium calls (the
    typical AutoVC shapes) take a fused XLA dot in f32; large calls take the Pallas
    kernel with bf16 compute (f32 accumulation) by default — pass use_bf16=False for
    bit-faithful f32 compute on the Pallas path too.
    """
    in_dim = x.shape[-1]
    out_dim = weight.shape[0]
    lead = x.shape[:-1]
    m = math.prod(lead) if lead else 1

    if m < min_rows or m * in_dim * out_dim < min_work:
        # Pallas launch + wrapper traffic would dominate: plain fused XLA dot (f32).
        y = lax.dot_general(
            x.reshape(m, in_dim), weight,
            dimension_numbers=(((1,), (1,)), ((), ())),
            preferred_element_type=jnp.float32,
        )
        if bias is not None:
            y = y + bias.astype(jnp.float32)
        return y.astype(x.dtype).reshape(*lead, out_dim)

    w_io, b_row, _ = prepare_linear_norm_weights(weight, bias, use_bf16=use_bf16)
    return linear_norm_apply(x, w_io, b_row, out_dim, use_bf16=use_bf16, **pallas_kw)


# ----------------------------------------------------------------------------
# Init + reference
# ----------------------------------------------------------------------------
def init_linear_norm_params(key, in_dim, out_dim, w_init_gain="linear"):
    """xavier_uniform_ weight (calculate_gain) + PyTorch-default nn.Linear bias init."""
    gain = {"linear": 1.0, "relu": math.sqrt(2.0), "tanh": 5.0 / 3.0}[w_init_gain]
    wkey, bkey = jax.random.split(key)
    w_bound = gain * math.sqrt(6.0 / (in_dim + out_dim))
    weight = jax.random.uniform(wkey, (out_dim, in_dim), minval=-w_bound, maxval=w_bound,
                                dtype=jnp.float32)
    b_bound = 1.0 / math.sqrt(in_dim)
    bias = jax.random.uniform(bkey, (out_dim,), minval=-b_bound, maxval=b_bound,
                              dtype=jnp.float32)
    return weight, bias


def _reference(x, weight, bias, compute_dtype=None):
    xc = x.astype(compute_dtype) if compute_dtype is not None else x
    wc = weight.astype(compute_dtype) if compute_dtype is not None else weight
    y = lax.dot_general(xc, wc,
                        dimension_numbers=(((x.ndim - 1,), (1,)), ((), ())),
                        preferred_element_type=jnp.float32)
    if bias is not None:
        y = y + bias.astype(jnp.float32)
    return y  # f32


if __name__ == "__main__":
    key = jax.random.PRNGKey(0)
    k1, k2, k3, k4, k5, k6 = jax.random.split(key, 6)

    # --- Test 1: Pallas path, default bf16 compute (gate forced off).
    # m=192, K=256, out=80 -> N padded to 128, single K tile, M split for 2 TCs.
    B, T, in_dim, out_dim = 2, 96, 256, 80
    x = jax.random.normal(k1, (B, T, in_dim), dtype=jnp.float32)
    weight, bias = init_linear_norm_params(k2, in_dim, out_dim)
    y = linear_norm(x, weight, bias, min_rows=0, min_work=0)
    jax.block_until_ready(y)
    assert y.shape == (B, T, out_dim)
    ref_q = _reference(x, weight, bias, jnp.bfloat16)
    ref_f = _reference(x, weight, bias)
    assert jnp.allclose(y.astype(jnp.float32), ref_q, atol=2e-3, rtol=2e-3), "bf16 pallas mismatch"
    assert jnp.allclose(y.astype(jnp.float32), ref_f, atol=6e-2, rtol=6e-2), "bf16 vs f32 drifted"

    # --- Test 2: Pallas path, f32 compute, multi-step K + M grid (fused o_ref accumulation).
    y2 = linear_norm(x, weight, bias, use_bf16=False, min_rows=0, min_work=0,
                     tm_cap=64, tk_cap=128)  # grid = (3, 1, 2)
    jax.block_until_ready(y2)
    assert jnp.allclose(y2.astype(jnp.float32), ref_f, atol=2e-4, rtol=2e-4), "f32 pallas mismatch"

    # --- Test 3: bf16 input/output with multi-step K -> f32 VMEM scratch kernel.
    B3, T3, in3, out3 = 2, 64, 256, 160
    x3 = jax.random.normal(k3, (B3, T3, in3), dtype=jnp.float32).astype(jnp.bfloat16)
    w3, b3 = init_linear_norm_params(k4, in3, out3)
    y3 = linear_norm(x3, w3, b3, min_rows=0, min_work=0, tk_cap=128)
    jax.block_until_ready(y3)
    ref3 = _reference(x3.astype(jnp.float32), w3, b3, jnp.bfloat16)
    assert y3.dtype == jnp.bfloat16 and y3.shape == (B3, T3, out3)
    assert jnp.allclose(y3.astype(jnp.float32), ref3, atol=5e-2, rtol=5e-2), "bf16-out mismatch"

    # --- Test 4: default size gate -> fused XLA fallback for small AutoVC-sized calls.
    x4 = jax.random.normal(k5, (2, 8, 32), dtype=jnp.float32)
    w4, b4 = init_linear_norm_params(k6, 32, 16)
    y4 = linear_norm(x4, w4, b4)
    jax.block_until_ready(y4)
    assert jnp.allclose(y4.astype(jnp.float32), _reference(x4, w4, b4),
                        atol=1e-5, rtol=1e-5), "fallback mismatch"

    print("KERNEL_OK")
</pallas_src>

<mosaic_0001>
module attributes {stable_mosaic.version = 11 : i64} {
  func.func @_linear_kernel_fused(%arg0: i32, %arg1: i32, %arg2: i32, %arg3: memref<96x256xf32, #tpu.memory_space<vmem>>, %arg4: memref<256x128xbf16, #tpu.memory_space<vmem>>, %arg5: memref<1x128xf32, #tpu.memory_space<vmem>>, %arg6: memref<96x128xf32, #tpu.memory_space<vmem>>) attributes {dimension_semantics = [#tpu.dimension_semantics<parallel>, #tpu.dimension_semantics<parallel>, #tpu.dimension_semantics<arbitrary>], iteration_bounds = array<i64: 2, 1, 1>, scalar_prefetch = 0 : i64, scratch_operands = 0 : i64, tpu.core_type = #tpu.core_type<tc>, window_params = [{transform_indices = @transform_0, window_bounds = array<i64: 96, 256>}, {transform_indices = @transform_1, window_bounds = array<i64: 256, 128>}, {transform_indices = @transform_2, window_bounds = array<i64: 1, 128>}, {transform_indices = @transform_3, window_bounds = array<i64: 96, 128>}]} {
    %c0 = arith.constant 0 : index
    %c0_0 = arith.constant 0 : index
    %0 = vector.load %arg3[%c0, %c0_0] : memref<96x256xf32, #tpu.memory_space<vmem>>, vector<96x256xf32>
    %1 = arith.truncf %0 : vector<96x256xf32> to vector<96x256xbf16>
    %c0_1 = arith.constant 0 : index
    %c0_2 = arith.constant 0 : index
    %2 = vector.load %arg4[%c0_1, %c0_2] : memref<256x128xbf16, #tpu.memory_space<vmem>>, vector<256x128xbf16>
    %cst = arith.constant dense<0.000000e+00> : vector<96x128xf32>
    %3 = tpu.matmul %1, %2, %cst {dimension_numbers = #tpu.dot_dimension_numbers<[1], [0], [0], [1], [0, 0, 1, 1], [], []>} : vector<96x256xbf16>, vector<256x128xbf16>, vector<96x128xf32> -> vector<96x128xf32>
    %c0_i32 = arith.constant 0 : i32
    %4 = arith.cmpi eq, %arg2, %c0_i32 : i32
    %5 = arith.extui %4 : i1 to i32
    %c0_i32_3 = arith.constant 0 : i32
    %6 = arith.cmpi ne, %5, %c0_i32_3 : i32
    scf.if %6 {
      %c0_6 = arith.constant 0 : index
      %c0_7 = arith.constant 0 : index
      %10 = vector.load %arg5[%c0_6, %c0_7] : memref<1x128xf32, #tpu.memory_space<vmem>>, vector<1x128xf32>
      %11 = vector.broadcast %10 : vector<1x128xf32> to vector<96x128xf32>
      %12 = arith.addf %11, %3 : vector<96x128xf32>
      %c0_8 = arith.constant 0 : index
      %c0_9 = arith.constant 0 : index
      %13 = vector.load %arg6[%c0_8, %c0_9] : memref<96x128xf32, #tpu.memory_space<vmem>>, vector<96x128xf32>
      tpu.vector_store %arg6[%c0_8, %c0_9], %12 {strides = array<i32>} : memref<96x128xf32, #tpu.memory_space<vmem>>, vector<96x128xf32>,
    } else {
    }
    %c0_i32_4 = arith.constant 0 : i32
    %7 = arith.cmpi ne, %arg2, %c0_i32_4 : i32
    %8 = arith.extui %7 : i1 to i32
    %c0_i32_5 = arith.constant 0 : i32
    %9 = arith.cmpi ne, %8, %c0_i32_5 : i32
    scf.if %9 {
      %c0_6 = arith.constant 0 : index
      %c0_7 = arith.constant 0 : index
      %10 = vector.load %arg6[%c0_6, %c0_7] : memref<96x128xf32, #tpu.memory_space<vmem>>, vector<96x128xf32>
      %11 = arith.addf %10, %3 : vector<96x128xf32>
      %c0_8 = arith.constant 0 : index
      %c0_9 = arith.constant 0 : index
      %12 = vector.load %arg6[%c0_8, %c0_9] : memref<96x128xf32, #tpu.memory_space<vmem>>, vector<96x128xf32>
      tpu.vector_store %arg6[%c0_8, %c0_9], %11 {strides = array<i32>} : memref<96x128xf32, #tpu.memory_space<vmem>>, vector<96x128xf32>,
    } else {
    }
    return
  }
  func.func @transform_0(%arg0: i32, %arg1: i32, %arg2: i32) -> (i32, i32) {
    %c0_i32 = arith.constant 0 : i32
    return %arg0, %arg2 : i32, i32
  }
  func.func @transform_1(%arg0: i32, %arg1: i32, %arg2: i32) -> (i32, i32) {
    %c0_i32 = arith.constant 0 : i32
    return %arg2, %arg1 : i32, i32
  }
  func.func @transform_2(%arg0: i32, %arg1: i32, %arg2: i32) -> (i32, i32) {
    %c0_i32 = arith.constant 0 : i32
    %c0_i32_0 = arith.constant 0 : i32
    return %c0_i32, %arg1 : i32, i32
  }
  func.func @transform_3(%arg0: i32, %arg1: i32, %arg2: i32) -> (i32, i32) {
    %c0_i32 = arith.constant 0 : i32
    return %arg0, %arg1 : i32, i32
  }
}

</mosaic_0001>

<llo_original>
// kernel: tpu_custom_call.1
$region0: #{tpu_custom_call.1}
  #allocation0 [shape = 'u32[]', space=smem, size = 0x4, offset = 0x4, fixed_abs, tag = 'smem constant byte address 0x4 - core index']
  #allocation1 [shape = 'u32[144,128]{1,0:T(1,128)}', space=vmem, size = 0x12000, scoped, tag = 'internal scratch']
  %s0 = inlined_call_operand.hbm [shape: f32[192,256], index: 0, kind: input, shape index: {}]
  %s1 = inlined_call_operand.hbm [shape: bf16[256,128], index: 1, kind: input, shape index: {}]
  %s2 = inlined_call_operand.vmem [shape: f32[1,128], index: 2, kind: input, shape index: {}]
  %s3 = inlined_call_operand.hbm [shape: f32[192,128], index: 3, kind: output, shape index: {}]
  %s4 = sld [smem:[#allocation0]]
  $region61: #{tpu_custom_call.1} parent=0
    _
  %s6 = ssub.s32 1, %s4
  %s7 = scalar_select 0, %s6, %s4
  $region1: #{tpu_custom_call.1} parent=0
    #allocation2 [shape = 'u8[196608]{0}', space=vmem, size = 0x30000, scoped, tag = 'input window, operand 0']
    #allocation3 [shape = 's32[2]{0}', space=sflag, size = 0x8, scoped, tag = 'scoped memory for tpu_custom_call.1']
    #allocation4 [shape = 's32[2]{0}', space=sflag, size = 0x8, scoped, tag = 'scoped memory for tpu_custom_call.1']
    #allocation5 [shape = 'u8[65536]{0}', space=vmem, size = 0x10000, scoped, tag = 'input window, operand 1, single buffered']
    #allocation6 [shape = 's32[1]{0}', space=sflag, size = 0x4, scoped, tag = 'scoped memory for tpu_custom_call.1']
    #allocation7 [shape = 'u8[98304]{0}', space=vmem, size = 0x18000, scoped, tag = 'output window, operand 0']
    %8 = vsyncpa [#allocation3], 0
    %s9 = scalar_lea.sflag [#allocation3], 1
    %10 = vsyncpa %s9, 0
    %11 = vsyncpa [#allocation6], 0
    %12 = vsyncpa [#allocation4], 0
    %s13 = scalar_lea.sflag [#allocation4], 1
    %14 = vsyncpa %s13, 0
    loop: start=0, step=1, limit=4
    $region2: #{tpu_custom_call.1} parent=1 // loop_pre_header
      _
    $region3: #{tpu_custom_call.1} parent=1 // loop_header
      %s16 = sphi 0, %s20
      %p17 = scmp.ge.s32.totalorder %s16, 4
      %s23 = sphi 0, %s42
      %s24 = sphi 0, %s38
      %s25 = sphi 0, %s34
      %s26 = sphi 0, %s23
      %s27 = sphi 0, %s24
      %s28 = sphi 0, %s25
      %s29 = sphi 0, %s26
      %s30 = sphi 0, %s27
      %s31 = sphi 0, %s28
      %s47 = sphi 0, %s49
      %s50 = sphi 0, %s47
      %s51 = sphi 0, %s50
      %s67 = sphi 0, %s51
      %s75 = sphi 0, %s77
      %s78 = sphi 0, %s75
      %s79 = sphi 0, %s78
      %s95 = sphi 0, %s79
      %s101 = sphi 0, %s103
      %s104 = sphi 0, %s101
      %s105 = sphi 0, %s104
      %s121 = sphi 0, %s105
      %s129 = sphi 0, %s131
      %s132 = sphi 0, %s129
      %s133 = sphi 0, %s132
      %s149 = sphi 0, %s133
    $region4: #{tpu_custom_call.1} parent=1 // loop_header_branch
      %19 = sbr.rel (%p17) target = $region8
    $region5: #{tpu_custom_call.1} parent=1 // loop_body
      %s21 = ssub.s32 %s16, 1
      %s22 = ssub.s32 %s16, 2
      %s32 = sadd.s32 1, %s25
      %p33 = scmp.ge.s32.totalorder %s32, 1
      %s34 = scalar_select %p33, 0, %s32
      %s35 = sadd.s32 1, %s24
      %s36 = scalar_select %p33, %s35, %s24
      %p37 = scmp.ge.s32.totalorder %s36, 1
      %s38 = scalar_select %p37, 0, %s36
      %s39 = sadd.s32 1, %s23
      %s40 = scalar_select %p37, %s39, %s23
      %p41 = scmp.ge.s32.totalorder %s40, 2
      %s42 = scalar_select %p41, 0, %s40
      %s43 = ssub.s32 %s23, %s42
      %s44 = ssub.s32 %s25, %s34
      %s45 = sor.u32 %s43, %s44
      %p46 = scmp.eq.s32.totalorder %s45, 0
      %s48 = sadd.s32 %s47, 1
      %s49 = scalar_select %p46, %s47, %s48
      %p52 = pneg %p46
      %p53 = scmp.eq.s32.totalorder %s16, 1
      %p54 = por %p52, %p53
      %p55 = scmp.ne.s32.totalorder %s47, %s50
      %p56 = scmp.eq.s32.totalorder %s16, 0
      %p57 = por %p55, %p56
      %p58 = scmp.ne.s32.totalorder %s47, %s50
      %p59 = scmp.eq.s32.totalorder %s21, 1
      %p60 = por %p58, %p59
      %p61 = scmp.ne.s32.totalorder %s50, %s51
      %p62 = scmp.eq.s32.totalorder %s21, 0
      %p63 = por %p61, %p62
      %p64 = scmp.ne.s32.totalorder %s50, %s51
      %p65 = scmp.eq.s32.totalorder %s22, 1
      %p66 = por %p64, %p65
      %p68 = scmp.ne.s32.totalorder %s51, %s67
      %p69 = scmp.eq.s32.totalorder %s22, 0
      %p70 = por %p68, %p69
      %s71 = ssub.s32 %s25, %s34
      %s72 = ssub.s32 %s24, %s38
      %s73 = sor.u32 %s71, %s72
      %p74 = scmp.eq.s32.totalorder %s73, 0
      %s76 = sadd.s32 %s75, 1
      %s77 = scalar_select %p74, %s75, %s76
      %p80 = pneg %p74
      %p81 = scmp.eq.s32.totalorder %s16, 1
      %p82 = por %p80, %p81
      %p83 = scmp.ne.s32.totalorder %s75, %s78
      %p84 = scmp.eq.s32.totalorder %s16, 0
      %p85 = por %p83, %p84
      %p86 = scmp.ne.s32.totalorder %s75, %s78
      %p87 = scmp.eq.s32.totalorder %s21, 1
      %p88 = por %p86, %p87
      %p89 = scmp.ne.s32.totalorder %s78, %s79
      %p90 = scmp.eq.s32.totalorder %s21, 0
      %p91 = por %p89, %p90
      %p92 = scmp.ne.s32.totalorder %s78, %s79
      %p93 = scmp.eq.s32.totalorder %s22, 1
      %p94 = por %p92, %p93
      %p96 = scmp.ne.s32.totalorder %s79, %s95
      %p97 = scmp.eq.s32.totalorder %s22, 0
      %p98 = por %p96, %p97
      %s99 = ssub.s32 %s24, %s38
      %p100 = scmp.eq.s32.totalorder %s99, 0
      %s102 = sadd.s32 %s101, 1
      %s103 = scalar_select %p100, %s101, %s102
      %p106 = pneg %p100
      %p107 = scmp.eq.s32.totalorder %s16, 1
      %p108 = por %p106, %p107
      %p109 = scmp.ne.s32.totalorder %s101, %s104
      %p110 = scmp.eq.s32.totalorder %s16, 0
      %p111 = por %p109, %p110
      %p112 = scmp.ne.s32.totalorder %s101, %s104
      %p113 = scmp.eq.s32.totalorder %s21, 1
      %p114 = por %p112, %p113
      %p115 = scmp.ne.s32.totalorder %s104, %s105
      %p116 = scmp.eq.s32.totalorder %s21, 0
      %p117 = por %p115, %p116
      %p118 = scmp.ne.s32.totalorder %s104, %s105
      %p119 = scmp.eq.s32.totalorder %s22, 1
      %p120 = por %p118, %p119
      %p122 = scmp.ne.s32.totalorder %s105, %s121
      %p123 = scmp.eq.s32.totalorder %s22, 0
      %p124 = por %p122, %p123
      %s125 = ssub.s32 %s23, %s42
      %s126 = ssub.s32 %s24, %s38
      %s127 = sor.u32 %s125, %s126
      %p128 = scmp.eq.s32.totalorder %s127, 0
      %s130 = sadd.s32 %s129, 1
      %s131 = scalar_select %p128, %s129, %s130
      %p134 = pneg %p128
      %p135 = scmp.eq.s32.totalorder %s16, 1
      %p136 = por %p134, %p135
      %p137 = scmp.ne.s32.totalorder %s129, %s132
      %p138 = scmp.eq.s32.totalorder %s16, 0
      %p139 = por %p137, %p138
      %p140 = scmp.ne.s32.totalorder %s129, %s132
      %p141 = scmp.eq.s32.totalorder %s21, 1
      %p142 = por %p140, %p141
      %p143 = scmp.ne.s32.totalorder %s132, %s133
      %p144 = scmp.eq.s32.totalorder %s21, 0
      %p145 = por %p143, %p144
      %p146 = scmp.ne.s32.totalorder %s132, %s133
      %p147 = scmp.eq.s32.totalorder %s22, 1
      %p148 = por %p146, %p147
      %p150 = scmp.ne.s32.totalorder %s133, %s149
      %p151 = scmp.eq.s32.totalorder %s22, 0
      %p152 = por %p150, %p151
      %p153 = scmp.le.s32.totalorder 1, %s16
      %p154 = scmp.lt.s32.totalorder %s16, 3
      %p155 = pnand %p153, %p154
      %p156 = pneg %p155
      // Predicated region
      $region9: #{tpu_custom_call.1} parent=5 // pred_check
        _
      $region10: #{tpu_custom_call.1} parent=5 // pred_check_branch
        %158 = sbr.rel (%p155) target = $region12
      $region11: #{tpu_custom_call.1} parent=5 // pred_region
        %s159 = ssub.s32 %s16, 1
        // Predicated region
        $region13: #{tpu_custom_call.1} parent=11 // pred_check
          %p160 = pneg %p91
        $region14: #{tpu_custom_call.1} parent=11 // pred_check_branch
          %162 = sbr.rel (%p160) target = $region16
        $region15: #{tpu_custom_call.1} parent=11 // pred_region
          %s163 = smul.u32 32, %s28
          %s165 = ssub.s32 2048, 2048
          %166 = vsyncadd [#allocation6], %s165
          %s167 = sadd.s32 %s27, %s163
          %s168 = smul.addr %s167, 64
          %s169 = scalar_lea.hbm %s1, %s168
          %s170 = sshll.u32 [#allocation5], 4
          %s171 = int_to_ptr.vmem [resolvable:$true] %s170
          %176 = dma.hbm_to_vmem [thread:$0]  %s169, 2048, %s171, [#allocation6], 64, 64, 4
        $region16: #{tpu_custom_call.1} parent=11 // pred_fallthru
          _
        // Predicated region
        $region17: #{tpu_custom_call.1} parent=11 // pred_check
          %p177 = pneg %p117
        $region18: #{tpu_custom_call.1} parent=11 // pred_check_branch
          %179 = sbr.rel (%p177) target = $region20
        $region19: #{tpu_custom_call.1} parent=11 // pred_region
          %p180 = scmp.lt.s32.totalorder %s27, 0
          %s181 = scalar_select %p180, %s27, 0
          %s182 = scalar_lea.vmem %s2, %s181
        $region20: #{tpu_custom_call.1} parent=11 // pred_fallthru
          _
      $region12: #{tpu_custom_call.1} parent=5 // pred_fallthru
        _
      %p183 = scmp.lt.s32.totalorder %s16, 2
      // Predicated region
      $region21: #{tpu_custom_call.1} parent=5 // pred_check
        %p184 = pneg %p183
      $region22: #{tpu_custom_call.1} parent=5 // pred_check_branch
        %186 = sbr.rel (%p184) target = $region24
      $region23: #{tpu_custom_call.1} parent=5 // pred_region
        // Predicated region
        $region25: #{tpu_custom_call.1} parent=23 // pred_check
          %p187 = pneg %p57
        $region26: #{tpu_custom_call.1} parent=23 // pred_check_branch
          %189 = sbr.rel (%p187) target = $region28
        $region27: #{tpu_custom_call.1} parent=23 // pred_region
          %s190 = sand.u32 %s47, 1
          %s191 = scalar_lea.sflag [#allocation3], %s190
          %s192 = sand.u32 %s47, 1
          %s193 = smul.addr %s192, 192
          %s194 = scalar_lea.vmem [#allocation2], %s193
          %s195 = smul.u32 12, %s23
          %s196 = smul.u32 2, %s25
          %s198 = ssub.s32 3072, 3072
          %199 = vsyncadd %s191, %s198
          %s200 = smul.addr %s195, 2
          %s201 = sadd.s32 %s196, %s200
          %s202 = smul.addr %s201, 128
          %s203 = scalar_lea.hbm %s0, %s202
          %s204 = sshll.u32 %s194, 4
          %s205 = int_to_ptr.vmem [resolvable:$true] %s204
          %210 = dma.hbm_to_vmem [thread:$0]  %s203, 3072, %s205, %s191, 256, 256, 16
        $region28: #{tpu_custom_call.1} parent=23 // pred_fallthru
          _
      $region24: #{tpu_custom_call.1} parent=5 // pred_fallthru
        _
      %p211 = scmp.le.s32.totalorder 1, %s16
      %p212 = scmp.lt.s32.totalorder %s16, 3
      %p213 = pnand %p211, %p212
      %p214 = pneg %p213
      // Predicated region
      $region29: #{tpu_custom_call.1} parent=5 // pred_check
        _
      $region30: #{tpu_custom_call.1} parent=5 // pred_check_branch
        %216 = sbr.rel (%p213) target = $region32
      $region31: #{tpu_custom_call.1} parent=5 // pred_region
        %s217 = ssub.s32 %s16, 1
        %s218 = sand.u32 %s50, 1
        %s219 = scalar_lea.sflag [#allocation3], %s218
        %s220 = sand.u32 %s50, 1
        %s221 = smul.addr %s220, 192
        %s222 = scalar_lea.vmem [#allocation2], %s221
        // Predicated region
        $region33: #{tpu_custom_call.1} parent=31 // pred_check
          %p223 = pneg %p63
        $region34: #{tpu_custom_call.1} parent=31 // pred_check_branch
          %225 = sbr.rel (%p223) target = $region36
        $region35: #{tpu_custom_call.1} parent=31 // pred_region
          %226 = dma.done %s219, 3072
        $region36: #{tpu_custom_call.1} parent=31 // pred_fallthru
          _
        // Predicated region
        $region37: #{tpu_custom_call.1} parent=31 // pred_check
          %p227 = pneg %p91
        $region38: #{tpu_custom_call.1} parent=31 // pred_check_branch
          %229 = sbr.rel (%p227) target = $region40
        $region39: #{tpu_custom_call.1} parent=31 // pred_region
          %230 = dma.done [#allocation6], 2048
        $region40: #{tpu_custom_call.1} parent=31 // pred_fallthru
          _
        %s231 = sand.u32 %s50, 1
        %s232 = scalar_lea.sflag [#allocation3], %s231
        %s233 = sand.u32 %s50, 1
        %s234 = smul.addr %s233, 192
        %s235 = scalar_lea.vmem [#allocation2], %s234
        %p236 = pneg %p63
        %p237 = pneg %p60
        %p238 = pneg %p91
        %p239 = pneg %p88
        %p240 = scmp.lt.s32.totalorder %s27, 0
        %s241 = scalar_select %p240, %s27, 0
        %s242 = scalar_lea.vmem %s2, %s241
        %p243 = pneg %p117
        %p244 = pneg %p114
        %p245 = pneg %p145
        %p246 = pneg %p142
        %s247 = sand.u32 %s132, 1
        %s248 = scalar_lea.sflag [#allocation4], %s247
        %s249 = sand.u32 %s132, 1
        %s250 = smul.addr %s249, 96
        %s251 = scalar_lea.vmem [#allocation7], %s250
        %s252 = smul.u32 12, %s26
        %s253 = smul.u32 2, %s28
        %s254 = smul.u32 32, %s28
        %p255 = scmp.lt.s32.totalorder %s27, 0
        %s256 = scalar_select %p255, %s27, 0
        %s257 = scalar_lea.vmem %s2, %s256
        %s258 = smul.u32 12, %s26
        %v260 = vld [vmem:[%s222] sm:$0xff]
        %v261 = vld [vmem:[%s222 + $0x8] sm:$0xff]
        %v262 = vld [vmem:[%s222 + $0x10] sm:$0xff]
        %v263 = vld [vmem:[%s222 + $0x18] sm:$0xff]
        %v264 = vld [vmem:[%s222 + $0x20] sm:$0xff]
        %v265 = vld [vmem:[%s222 + $0x28] sm:$0xff]
        %v266 = vld [vmem:[%s222 + $0x30] sm:$0xff]
        %v267 = vld [vmem:[%s222 + $0x38] sm:$0xff]
        %v268 = vld [vmem:[%s222 + $0x40] sm:$0xff]
        %v269 = vld [vmem:[%s222 + $0x48] sm:$0xff]
        %v270 = vld [vmem:[%s222 + $0x50] sm:$0xff]
        %v271 = vld [vmem:[%s222 + $0x58] sm:$0xff]
        %v272 = vld [vmem:[%s222 + $0x60] sm:$0xff]
        %v273 = vld [vmem:[%s222 + $0x68] sm:$0xff]
        %v274 = vld [vmem:[%s222 + $0x70] sm:$0xff]
        %v275 = vld [vmem:[%s222 + $0x78] sm:$0xff]
        %v276 = vld [vmem:[%s222 + $0x80] sm:$0xff]
        %v277 = vld [vmem:[%s222 + $0x88] sm:$0xff]
        %v278 = vld [vmem:[%s222 + $0x90] sm:$0xff]
        %v279 = vld [vmem:[%s222 + $0x98] sm:$0xff]
        %v280 = vld [vmem:[%s222 + $0xa0] sm:$0xff]
        %v281 = vld [vmem:[%s222 + $0xa8] sm:$0xff]
        %v282 = vld [vmem:[%s222 + $0xb0] sm:$0xff]
        %v283 = vld [vmem:[%s222 + $0xb8] sm:$0xff]
        %v284 = vpack.c.bf16 %v262, %v260
        %v285 = vpack.c.bf16 %v263, %v261
        %v286 = vpack.c.bf16 %v266, %v264
        %v287 = vpack.c.bf16 %v267, %v265
        %v288 = vpack.c.bf16 %v270, %v268
        %v289 = vpack.c.bf16 %v271, %v269
        %v290 = vpack.c.bf16 %v274, %v272
        %v291 = vpack.c.bf16 %v275, %v273
        %v292 = vpack.c.bf16 %v278, %v276
        %v293 = vpack.c.bf16 %v279, %v277
        %v294 = vpack.c.bf16 %v282, %v280
        %v295 = vpack.c.bf16 %v283, %v281
        %v296 = vld [vmem:[#allocation5] sm:$0xf]
        %v297 = vld [vmem:[#allocation5 + $0x4] sm:$0xf]
        %v298 = vld [vmem:[#allocation5 + $0x8] sm:$0xf]
        %v299 = vld [vmem:[#allocation5 + $0xc] sm:$0xf]
        %v300 = vld [vmem:[#allocation5 + $0x10] sm:$0xf]
        %v301 = vld [vmem:[#allocation5 + $0x14] sm:$0xf]
        %v302 = vld [vmem:[#allocation5 + $0x18] sm:$0xf]
        %v303 = vld [vmem:[#allocation5 + $0x1c] sm:$0xf]
        %v304 = vld [vmem:[#allocation5 + $0x20] sm:$0xf]
        %v305 = vld [vmem:[#allocation5 + $0x24] sm:$0xf]
        %v306 = vld [vmem:[#allocation5 + $0x28] sm:$0xf]
        %v307 = vld [vmem:[#allocation5 + $0x2c] sm:$0xf]
        %v308 = vld [vmem:[#allocation5 + $0x30] sm:$0xf]
        %v309 = vld [vmem:[#allocation5 + $0x34] sm:$0xf]
        %v310 = vld [vmem:[#allocation5 + $0x38] sm:$0xf]
        %v311 = vld [vmem:[#allocation5 + $0x3c] sm:$0xf]
        %v312 = vld [vmem:[#allocation5 + $0x40] sm:$0xf]
        %v313 = vld [vmem:[#allocation5 + $0x44] sm:$0xf]
        %v314 = vld [vmem:[#allocation5 + $0x48] sm:$0xf]
        %v315 = vld [vmem:[#allocation5 + $0x4c] sm:$0xf]
        %v316 = vld [vmem:[#allocation5 + $0x50] sm:$0xf]
        %v317 = vld [vmem:[#allocation5 + $0x54] sm:$0xf]
        %v318 = vld [vmem:[#allocation5 + $0x58] sm:$0xf]
        %v319 = vld [vmem:[#allocation5 + $0x5c] sm:$0xf]
        %v320 = vld [vmem:[#allocation5 + $0x60] sm:$0xf]
        %v321 = vld [vmem:[#allocation5 + $0x64] sm:$0xf]
        %v322 = vld [vmem:[#allocation5 + $0x68] sm:$0xf]
        %v323 = vld [vmem:[#allocation5 + $0x6c] sm:$0xf]
        %v324 = vld [vmem:[#allocation5 + $0x70] sm:$0xf]
        %v325 = vld [vmem:[#allocation5 + $0x74] sm:$0xf]
        %v326 = vld [vmem:[#allocation5 + $0x78] sm:$0xf]
        %v327 = vld [vmem:[#allocation5 + $0x7c] sm:$0xf]
        %v360 = vunpack.c.l.b16 %v296
        %v361 = vunpack.c.l.b16 %v297
        %v362 = vunpack.c.l.b16 %v298
        %v363 = vunpack.c.l.b16 %v299
        %v364 = vunpack.c.l.b16 %v300
        %v365 = vunpack.c.l.b16 %v301
        %v366 = vunpack.c.l.b16 %v302
        %v367 = vunpack.c.l.b16 %v303
        %v368 = vunpack.c.l.b16 %v304
        %v369 = vunpack.c.l.b16 %v305
        %v370 = vunpack.c.l.b16 %v306
        %v371 = vunpack.c.l.b16 %v307
        %v372 = vunpack.c.l.b16 %v308
        %v373 = vunpack.c.l.b16 %v309
        %v374 = vunpack.c.l.b16 %v310
        %v375 = vunpack.c.l.b16 %v311
        %v376 = vunpack.c.l.b16 %v312
        %v377 = vunpack.c.l.b16 %v313
        %v378 = vunpack.c.l.b16 %v314
        %v379 = vunpack.c.l.b16 %v315
        %v380 = vunpack.c.l.b16 %v316
        %v381 = vunpack.c.l.b16 %v317
        %v382 = vunpack.c.l.b16 %v318
        %v383 = vunpack.c.l.b16 %v319
        %v384 = vunpack.c.l.b16 %v320
        %v385 = vunpack.c.l.b16 %v321
        %v386 = vunpack.c.l.b16 %v322
        %v387 = vunpack.c.l.b16 %v323
        %v388 = vunpack.c.l.b16 %v324
        %v389 = vunpack.c.l.b16 %v325
        %v390 = vunpack.c.l.b16 %v326
        %v391 = vunpack.c.l.b16 %v327
        %v392 = vpack.c.b16 %v361, %v360
        %v393 = vpack.c.b16 %v363, %v362
        %v394 = vpack.c.b16 %v365, %v364
        %v395 = vpack.c.b16 %v367, %v366
        %v396 = vpack.c.b16 %v369, %v368
        %v397 = vpack.c.b16 %v371, %v370
        %v398 = vpack.c.b16 %v373, %v372
        %v399 = vpack.c.b16 %v375, %v374
        %v400 = vpack.c.b16 %v377, %v376
        %v401 = vpack.c.b16 %v379, %v378
        %v402 = vpack.c.b16 %v381, %v380
        %v403 = vpack.c.b16 %v383, %v382
        %v404 = vpack.c.b16 %v385, %v384
        %v405 = vpack.c.b16 %v387, %v386
        %v406 = vpack.c.b16 %v389, %v388
        %v407 = vpack.c.b16 %v391, %v390
        %424 = vmatprep.subr.bf16.mxu0 0
        %425 = vmatpush1.bf16.msra.mxu0 %v399
        %426 = vmatprep.subr.bf16.mxu0 0
        %427 = vmatpush1.bf16.msra.mxu0 %v398
        %428 = vmatprep.subr.bf16.mxu0 0
        %429 = vmatpush1.bf16.msra.mxu0 %v397
        %430 = vmatprep.subr.bf16.mxu0 0
        %431 = vmatpush1.bf16.msra.mxu0 %v396
        %432 = vmatprep.subr.bf16.mxu0 0
        %433 = vmatpush1.bf16.msra.mxu0 %v395
        %434 = vmatprep.subr.bf16.mxu0 0
        %435 = vmatpush1.bf16.msra.mxu0 %v394
        %436 = vmatprep.subr.bf16.mxu0 0
        %437 = vmatpush1.bf16.msra.mxu0 %v393
        %438 = vmatprep.subr.bf16.mxu0 0
        %439 = vmatpush1.bf16.msra.mxu0 %v392
        %440 = vmatprep.subr.bf16.mxu0 0
        %441 = vmatpush2.bf16.msra.mxu0 %v407
        %442 = vmatprep.subr.bf16.mxu0 0
        %443 = vmatpush2.bf16.msra.mxu0 %v406
        %444 = vmatprep.subr.bf16.mxu0 0
        %445 = vmatpush2.bf16.msra.mxu0 %v405
        %446 = vmatprep.subr.bf16.mxu0 0
        %447 = vmatpush2.bf16.msra.mxu0 %v404
        %448 = vmatprep.subr.bf16.mxu0 0
        %449 = vmatpush2.bf16.msra.mxu0 %v403
        %450 = vmatprep.subr.bf16.mxu0 0
        %451 = vmatpush2.bf16.msra.mxu0 %v402
        %452 = vmatprep.subr.bf16.mxu0 0
        %453 = vmatpush2.bf16.msra.mxu0 %v401
        %454 = vmatprep.subr.bf16.mxu0 0
        %455 = vmatpush2.bf16.msra.mxu0 %v400
        %456 = vmatprep.mubr.bf16.mxu0 %v285
        %457 = vmatmul.mubr.bf16.gmra.mxu0 %v284
        %v458 = vpop.f32.mrf.mxu0
        %v459 = vadd.f32 0.0, %v458
        %v460 = vpop.f32.mrf.mxu0
        %v461 = vpop.f32.mrf.mxu0
        %v462 = vadd.f32 0.0, %v461
        %v463 = vpop.f32.mrf.mxu0
        %464 = vmatprep.mubr.bf16.mxu0 %v287
        %465 = vmatmul.mubr.bf16.gmra.mxu0 %v286
        %v466 = vpop.f32.mrf.mxu0
        %v467 = vadd.f32 0.0, %v466
        %v468 = vpop.f32.mrf.mxu0
        %v469 = vpop.f32.mrf.mxu0
        %v470 = vadd.f32 0.0, %v469
        %v471 = vpop.f32.mrf.mxu0
        %472 = vmatprep.mubr.bf16.mxu0 %v289
        %473 = vmatmul.mubr.bf16.gmra.mxu0 %v288
        %v474 = vpop.f32.mrf.mxu0
        %v475 = vadd.f32 0.0, %v474
        %v476 = vpop.f32.mrf.mxu0
        %v477 = vpop.f32.mrf.mxu0
        %v478 = vadd.f32 0.0, %v477
        %v479 = vpop.f32.mrf.mxu0
        %480 = vmatprep.mubr.bf16.mxu0 %v291
        %481 = vmatmul.mubr.bf16.gmra.mxu0 %v290
        %v482 = vpop.f32.mrf.mxu0
        %v483 = vadd.f32 0.0, %v482
        %v484 = vpop.f32.mrf.mxu0
        %v485 = vpop.f32.mrf.mxu0
        %v486 = vadd.f32 0.0, %v485
        %v487 = vpop.f32.mrf.mxu0
        %488 = vmatprep.mubr.bf16.mxu0 %v293
        %489 = vmatmul.mubr.bf16.gmra.mxu0 %v292
        %v490 = vpop.f32.mrf.mxu0
        %v491 = vadd.f32 0.0, %v490
        %v492 = vpop.f32.mrf.mxu0
        %v493 = vpop.f32.mrf.mxu0
        %v494 = vadd.f32 0.0, %v493
        %v495 = vpop.f32.mrf.mxu0
        %496 = vmatprep.mubr.bf16.mxu0 %v295
        %497 = vmatmul.mubr.bf16.gmra.mxu0 %v294
        %v498 = vpop.f32.mrf.mxu0
        %v499 = vadd.f32 0.0, %v498
        %v500 = vpop.f32.mrf.mxu0
        %v501 = vpop.f32.mrf.mxu0
        %v502 = vadd.f32 0.0, %v501
        %v503 = vpop.f32.mrf.mxu0
        %504 = vdwg.mxu0
        %p505 = scmp.eq.s32.totalorder %s28, 0
        // Predicated region
        $region41: #{tpu_custom_call.1} parent=31 // pred_check
          %p506 = pneg %p505
        $region42: #{tpu_custom_call.1} parent=31 // pred_check_branch
          %508 = sbr.rel (%p506) target = $region44
        $region43: #{tpu_custom_call.1} parent=31 // pred_region
          %v509 = vld [vmem:[%s257] sm:$0x1]
          %v511 = vlaneseq
          %v512 = vshrl.u32 %v511, 7
          %v513 = vsub.s32 0, %v512
          %v514 = vrot.slane %v509, %v513
          %v516 = vadd.f32 %v514, %v459
          %v517 = vadd.f32 %v514, %v462
          %v518 = vadd.f32 %v514, %v467
          %v519 = vadd.f32 %v514, %v470
          %v520 = vadd.f32 %v514, %v475
          %v521 = vadd.f32 %v514, %v478
          %v522 = vadd.f32 %v514, %v483
          %v523 = vadd.f32 %v514, %v486
          %v524 = vadd.f32 %v514, %v491
          %v525 = vadd.f32 %v514, %v494
          %v526 = vadd.f32 %v514, %v499
          %v527 = vadd.f32 %v514, %v502
          %528 = vst [vmem:[%s251] sm:$0xff] %v516
          %529 = vst [vmem:[%s251 + $0x8] sm:$0xff] %v517
          %530 = vst [vmem:[%s251 + $0x10] sm:$0xff] %v518
          %531 = vst [vmem:[%s251 + $0x18] sm:$0xff] %v519
          %532 = vst [vmem:[%s251 + $0x20] sm:$0xff] %v520
          %533 = vst [vmem:[%s251 + $0x28] sm:$0xff] %v521
          %534 = vst [vmem:[%s251 + $0x30] sm:$0xff] %v522
          %535 = vst [vmem:[%s251 + $0x38] sm:$0xff] %v523
          %536 = vst [vmem:[%s251 + $0x40] sm:$0xff] %v524
          %537 = vst [vmem:[%s251 + $0x48] sm:$0xff] %v525
          %538 = vst [vmem:[%s251 + $0x50] sm:$0xff] %v526
          %539 = vst [vmem:[%s251 + $0x58] sm:$0xff] %v527
        $region44: #{tpu_custom_call.1} parent=31 // pred_fallthru
          _
        %p540 = scmp.ne.s32.totalorder %s28, 0
        // Predicated region
        $region45: #{tpu_custom_call.1} parent=31 // pred_check
          %p541 = pneg %p540
        $region46: #{tpu_custom_call.1} parent=31 // pred_check_branch
          %543 = sbr.rel (%p541) target = $region48
        $region47: #{tpu_custom_call.1} parent=31 // pred_region
          %v544 = vld [vmem:[%s251] sm:$0xff]
          %v545 = vld [vmem:[%s251 + $0x8] sm:$0xff]
          %v546 = vld [vmem:[%s251 + $0x10] sm:$0xff]
          %v547 = vld [vmem:[%s251 + $0x18] sm:$0xff]
          %v548 = vld [vmem:[%s251 + $0x20] sm:$0xff]
          %v549 = vld [vmem:[%s251 + $0x28] sm:$0xff]
          %v550 = vld [vmem:[%s251 + $0x30] sm:$0xff]
          %v551 = vld [vmem:[%s251 + $0x38] sm:$0xff]
          %v552 = vld [vmem:[%s251 + $0x40] sm:$0xff]
          %v553 = vld [vmem:[%s251 + $0x48] sm:$0xff]
          %v554 = vld [vmem:[%s251 + $0x50] sm:$0xff]
          %v555 = vld [vmem:[%s251 + $0x58] sm:$0xff]
          %v556 = vadd.f32 %v544, %v459
          %v557 = vadd.f32 %v545, %v462
          %v558 = vadd.f32 %v546, %v467
          %v559 = vadd.f32 %v547, %v470
          %v560 = vadd.f32 %v548, %v475
          %v561 = vadd.f32 %v549, %v478
          %v562 = vadd.f32 %v550, %v483
          %v563 = vadd.f32 %v551, %v486
          %v564 = vadd.f32 %v552, %v491
          %v565 = vadd.f32 %v553, %v494
          %v566 = vadd.f32 %v554, %v499
          %v567 = vadd.f32 %v555, %v502
          %568 = vst [vmem:[%s251] sm:$0xff] %v556
          %569 = vst [vmem:[%s251 + $0x8] sm:$0xff] %v557
          %570 = vst [vmem:[%s251 + $0x10] sm:$0xff] %v558
          %571 = vst [vmem:[%s251 + $0x18] sm:$0xff] %v559
          %572 = vst [vmem:[%s251 + $0x20] sm:$0xff] %v560
          %573 = vst [vmem:[%s251 + $0x28] sm:$0xff] %v561
          %574 = vst [vmem:[%s251 + $0x30] sm:$0xff] %v562
          %575 = vst [vmem:[%s251 + $0x38] sm:$0xff] %v563
          %576 = vst [vmem:[%s251 + $0x40] sm:$0xff] %v564
          %577 = vst [vmem:[%s251 + $0x48] sm:$0xff] %v565
          %578 = vst [vmem:[%s251 + $0x50] sm:$0xff] %v566
          %579 = vst [vmem:[%s251 + $0x58] sm:$0xff] %v567
        $region48: #{tpu_custom_call.1} parent=31 // pred_fallthru
          _
        %s580 = sand.u32 %s132, 1
        %s581 = scalar_lea.sflag [#allocation4], %s580
        %s582 = sand.u32 %s132, 1
        %s583 = smul.addr %s582, 96
        %s584 = scalar_lea.vmem [#allocation7], %s583
        // Predicated region
        $region49: #{tpu_custom_call.1} parent=31 // pred_check
          %p585 = pneg %p142
        $region50: #{tpu_custom_call.1} parent=31 // pred_check_branch
          %587 = sbr.rel (%p585) target = $region52
        $region51: #{tpu_custom_call.1} parent=31 // pred_region
          %s588 = smul.u32 12, %s26
          %s590 = ssub.s32 1536, 1536
          %591 = vsyncadd %s581, %s590
          %s592 = sadd.s32 %s27, %s588
          %s593 = smul.addr %s592, 128
          %s594 = scalar_lea.hbm %s3, %s593
          %s595 = sshll.u32 %s584, 4
          %s596 = int_to_ptr.vmem [resolvable:$true] %s595
          %601 = dma.vmem_to_hbm [thread:$0]  %s596, 1536, %s594, %s581, 128, 128, 8
        $region52: #{tpu_custom_call.1} parent=31 // pred_fallthru
          _
      $region32: #{tpu_custom_call.1} parent=5 // pred_fallthru
        _
      %p602 = scmp.le.s32.totalorder 2, %s16
      // Predicated region
      $region53: #{tpu_custom_call.1} parent=5 // pred_check
        %p603 = pneg %p602
      $region54: #{tpu_custom_call.1} parent=5 // pred_check_branch
        %605 = sbr.rel (%p603) target = $region56
      $region55: #{tpu_custom_call.1} parent=5 // pred_region
        %s606 = ssub.s32 %s16, 2
        // Predicated region
        $region57: #{tpu_custom_call.1} parent=55 // pred_check
          %p607 = pneg %p148
        $region58: #{tpu_custom_call.1} parent=55 // pred_check_branch
          %609 = sbr.rel (%p607) target = $region60
        $region59: #{tpu_custom_call.1} parent=55 // pred_region
          %s610 = sand.u32 %s133, 1
          %s611 = scalar_lea.sflag [#allocation4], %s610
          %s612 = sand.u32 %s133, 1
          %s613 = smul.addr %s612, 96
          %s614 = scalar_lea.vmem [#allocation7], %s613
          %615 = dma.done %s611, 1536
        $region60: #{tpu_custom_call.1} parent=55 // pred_fallthru
          _
      $region56: #{tpu_custom_call.1} parent=5 // pred_fallthru
        _
    $region6: #{tpu_custom_call.1} parent=1 // loop_footer
      %s20 = sadd.s32 1, %s16
    $region7: #{tpu_custom_call.1} parent=1 // loop_footer_branch
      %15 = sbr.rel target = $region3
    $region8: #{tpu_custom_call.1} parent=1 // loop_exit
      _
    %616 = vsyncpa [#allocation3], 1
    %s617 = scalar_lea.sflag [#allocation3], 1
    %618 = vsyncpa %s617, 1
    %619 = vsyncpa [#allocation6], 1
    %620 = vsyncpa [#allocation4], 1
    %s621 = scalar_lea.sflag [#allocation4], 1
    %622 = vsyncpa %s621, 1

</llo_original>
